<compile_context>
chip_gen: v5e
topology: v5e:2x2
jax: 0.10.0
libtpu: 0.0.40
codegen_flags: <defaults>
</compile_context>

<pallas_src>
import jax
import jax.numpy as jnp
from jax.experimental import pallas as pl
from jax.experimental.pallas import tpu as pltpu

_LANE = 128
_TARGET_TILE_BYTES = 2 * 1024 * 1024  # per-array tile size target (~2 MiB)


def _custom_loss_kernel(y_pred_ref, y_true_ref, w_ref, out_ref):
    yp = y_pred_ref[...]
    yt = y_true_ref[...]
    w = w_ref[...]
    if yp.dtype.itemsize < 4:
        # Compute in f32: v5e's VPU has no bf16 ALU; bandwidth win is storage-side.
        yp = yp.astype(jnp.float32)
        yt = yt.astype(jnp.float32)
        w = w.astype(jnp.float32)
    out_ref[...] = (jnp.abs(yp - yt) * w).astype(out_ref.dtype)


def custom_loss(y_pred, y_true, W):
    """loss = |y_pred - y_true| * W, elementwise; same shape/dtype as inputs."""
    assert y_pred.shape == y_true.shape == W.shape
    orig_shape = y_pred.shape
    dtype = y_pred.dtype
    n = y_pred.size
    itemsize = jnp.dtype(dtype).itemsize
    sublane = max(8, 32 // itemsize)  # 8 for f32, 16 for bf16, 32 for int8/fp8

    # Lane-dense width: wide (1024) for non-trivial sizes, minimal (128) for tiny.
    cols = 1024 if n >= sublane * 1024 else _LANE

    # Pad flat length so rows is a multiple of the sublane count.
    pad_unit = sublane * cols
    n_pad = ((n + pad_unit - 1) // pad_unit) * pad_unit
    rows = n_pad // cols

    def _prep(x):
        x = x.reshape(-1)
        if n_pad != n:
            x = jnp.pad(x, (0, n_pad - n))
        return x.reshape(rows, cols)

    yp2, yt2, w2 = _prep(y_pred), _prep(y_true), _prep(W)

    # Tile rows: ~2 MiB per array per tile, multiple of sublane, capped at rows.
    tr = min(rows, max(sublane, _TARGET_TILE_BYTES // (cols * itemsize)))
    tr = (tr // sublane) * sublane
    if tr >= rows:
        tr = rows  # single (full-extent) block in the row dimension

    grid = (pl.cdiv(rows, tr),)
    spec = pl.BlockSpec((tr, cols), lambda i: (i, 0))

    out2 = pl.pallas_call(
        _custom_loss_kernel,
        out_shape=jax.ShapeDtypeStruct((rows, cols), dtype),
        grid=grid,
        in_specs=[spec, spec, spec],
        out_specs=spec,
        compiler_params=pltpu.CompilerParams(
            dimension_semantics=("parallel",),
            vmem_limit_bytes=32 * 1024 * 1024,
        ),
    )(yp2, yt2, w2)

    out = out2.reshape(-1)
    if n_pad != n:
        out = out[:n]
    return out.reshape(orig_shape)


if __name__ == "__main__":
    key = jax.random.PRNGKey(0)
    k1, k2, k3 = jax.random.split(key, 3)

    # Reference shape from the PyTorch module usage: NCHW (2, 4, 16, 16).
    shape = (2, 4, 16, 16)
    y_pred = jax.random.normal(k1, shape, dtype=jnp.float32)
    y_true = jax.random.normal(k2, shape, dtype=jnp.float32)
    W = jax.random.uniform(k3, shape, dtype=jnp.float32)

    out = custom_loss(y_pred, y_true, W)
    out = jax.block_until_ready(out)

    ref = jnp.abs(y_pred - y_true) * W
    assert out.shape == shape
    assert jnp.allclose(out, ref, atol=1e-6, rtol=1e-6)

    # Exercise the non-128-divisible padding path with a second tiny case.
    shape2 = (3, 5, 7)
    a = jax.random.normal(k1, shape2, dtype=jnp.float32)
    b = jax.random.normal(k2, shape2, dtype=jnp.float32)
    w = jax.random.uniform(k3, shape2, dtype=jnp.float32)
    out2 = jax.block_until_ready(custom_loss(a, b, w))
    assert out2.shape == shape2
    assert jnp.allclose(out2, jnp.abs(a - b) * w, atol=1e-6, rtol=1e-6)

    print("KERNEL_OK")
</pallas_src>

<mosaic_0001>
module attributes {stable_mosaic.version = 11 : i64} {
  func.func @_custom_loss_kernel(%arg0: i32, %arg1: memref<16x128xf32, #tpu.memory_space<vmem>>, %arg2: memref<16x128xf32, #tpu.memory_space<vmem>>, %arg3: memref<16x128xf32, #tpu.memory_space<vmem>>, %arg4: memref<16x128xf32, #tpu.memory_space<vmem>>) attributes {dimension_semantics = [#tpu.dimension_semantics<parallel>], iteration_bounds = array<i64: 1>, scalar_prefetch = 0 : i64, scratch_operands = 0 : i64, tpu.core_type = #tpu.core_type<tc>, window_params = [{transform_indices = @transform_0, window_bounds = array<i64: 16, 128>}, {transform_indices = @transform_1, window_bounds = array<i64: 16, 128>}, {transform_indices = @transform_2, window_bounds = array<i64: 16, 128>}, {transform_indices = @transform_3, window_bounds = array<i64: 16, 128>}]} {
    %c0 = arith.constant 0 : index
    %c0_0 = arith.constant 0 : index
    %0 = vector.load %arg1[%c0, %c0_0] : memref<16x128xf32, #tpu.memory_space<vmem>>, vector<16x128xf32>
    %c0_1 = arith.constant 0 : index
    %c0_2 = arith.constant 0 : index
    %1 = vector.load %arg2[%c0_1, %c0_2] : memref<16x128xf32, #tpu.memory_space<vmem>>, vector<16x128xf32>
    %c0_3 = arith.constant 0 : index
    %c0_4 = arith.constant 0 : index
    %2 = vector.load %arg3[%c0_3, %c0_4] : memref<16x128xf32, #tpu.memory_space<vmem>>, vector<16x128xf32>
    %3 = arith.subf %0, %1 : vector<16x128xf32>
    %4 = math.absf %3 : vector<16x128xf32>
    %5 = arith.mulf %4, %2 : vector<16x128xf32>
    %c0_5 = arith.constant 0 : index
    %c0_6 = arith.constant 0 : index
    %6 = vector.load %arg4[%c0_5, %c0_6] : memref<16x128xf32, #tpu.memory_space<vmem>>, vector<16x128xf32>
    tpu.vector_store %arg4[%c0_5, %c0_6], %5 {strides = array<i32>} : memref<16x128xf32, #tpu.memory_space<vmem>>, vector<16x128xf32>,
    return
  }
  func.func @transform_0(%arg0: i32) -> (i32, i32) {
    %c0_i32 = arith.constant 0 : i32
    %c0_i32_0 = arith.constant 0 : i32
    return %arg0, %c0_i32 : i32, i32
  }
  func.func @transform_1(%arg0: i32) -> (i32, i32) {
    %c0_i32 = arith.constant 0 : i32
    %c0_i32_0 = arith.constant 0 : i32
    return %arg0, %c0_i32 : i32, i32
  }
  func.func @transform_2(%arg0: i32) -> (i32, i32) {
    %c0_i32 = arith.constant 0 : i32
    %c0_i32_0 = arith.constant 0 : i32
    return %arg0, %c0_i32 : i32, i32
  }
  func.func @transform_3(%arg0: i32) -> (i32, i32) {
    %c0_i32 = arith.constant 0 : i32
    %c0_i32_0 = arith.constant 0 : i32
    return %arg0, %c0_i32 : i32, i32
  }
}

</mosaic_0001>

<llo_original>
// kernel: tpu_custom_call.1
$region0: #{tpu_custom_call.1}
  #allocation0 [shape = 'u32[]', space=smem, size = 0x4, offset = 0x4, fixed_abs, tag = 'smem constant byte address 0x4 - core index']
  #allocation1 [shape = 'u32[72,128]{1,0:T(1,128)}', space=vmem, size = 0x9000, scoped, tag = 'internal scratch']
  %s0 = inlined_call_operand.hbm [shape: f32[16,128], index: 0, kind: input, shape index: {}]
  %s1 = inlined_call_operand.hbm [shape: f32[16,128], index: 1, kind: input, shape index: {}]
  %s2 = inlined_call_operand.hbm [shape: f32[16,128], index: 2, kind: input, shape index: {}]
  %s3 = inlined_call_operand.hbm [shape: f32[16,128], index: 3, kind: output, shape index: {}]
  %s4 = sld [smem:[#allocation0]]
  $region34: #{tpu_custom_call.1} parent=0
    _
  %s6 = ssub.s32 1, %s4
  %s7 = scalar_select 0, %s6, %s4
  $region1: #{tpu_custom_call.1} parent=0
    #allocation2 [shape = 'u8[8192]{0}', space=vmem, size = 0x2000, scoped, tag = 'input window, operand 0, single buffered']
    #allocation3 [shape = 's32[1]{0}', space=sflag, size = 0x4, scoped, tag = 'scoped memory for tpu_custom_call.1']
    #allocation4 [shape = 's32[1]{0}', space=sflag, size = 0x4, scoped, tag = 'scoped memory for tpu_custom_call.1']
    #allocation5 [shape = 'u8[8192]{0}', space=vmem, size = 0x2000, scoped, tag = 'input window, operand 1, single buffered']
    #allocation6 [shape = 's32[1]{0}', space=sflag, size = 0x4, scoped, tag = 'scoped memory for tpu_custom_call.1']
    #allocation7 [shape = 'u8[8192]{0}', space=vmem, size = 0x2000, scoped, tag = 'input window, operand 2, single buffered']
    #allocation8 [shape = 'u8[8192]{0}', space=vmem, size = 0x2000, scoped, tag = 'output window, operand 0, single buffered']
    %8 = vsyncpa [#allocation3], 0
    %9 = vsyncpa [#allocation6], 0
    %10 = vsyncpa [#allocation4], 0
    // Predicated region
    $region2: #{tpu_custom_call.1} parent=1 // pred_check
      _
    $region3: #{tpu_custom_call.1} parent=1 // pred_check_branch
      %12 = sbr.rel (0) target = $region5
    $region4: #{tpu_custom_call.1} parent=1 // pred_region
      %14 = vsyncadd [#allocation3], 0
      %s15 = sshll.u32 %s0, 4
      %s16 = int_to_ptr.hbm [resolvable:$true] %s15
      %s17 = sshll.u32 [#allocation2], 4
      %s18 = int_to_ptr.vmem [resolvable:$true] %s17
      %23 = dma.hbm_to_vmem [thread:$0]  %s16, 256, %s18, [#allocation3], 128, 128, 8
    $region5: #{tpu_custom_call.1} parent=1 // pred_fallthru
      _
    // Predicated region
    $region6: #{tpu_custom_call.1} parent=1 // pred_check
      _
    $region7: #{tpu_custom_call.1} parent=1 // pred_check_branch
      %25 = sbr.rel (0) target = $region9
    $region8: #{tpu_custom_call.1} parent=1 // pred_region
      %27 = vsyncadd [#allocation6], 0
      %s28 = sshll.u32 %s1, 4
      %s29 = int_to_ptr.hbm [resolvable:$true] %s28
      %s30 = sshll.u32 [#allocation5], 4
      %s31 = int_to_ptr.vmem [resolvable:$true] %s30
      %36 = dma.hbm_to_vmem [thread:$0]  %s29, 256, %s31, [#allocation6], 128, 128, 8
    $region9: #{tpu_custom_call.1} parent=1 // pred_fallthru
      _
    // Predicated region
    $region10: #{tpu_custom_call.1} parent=1 // pred_check
      _
    $region11: #{tpu_custom_call.1} parent=1 // pred_check_branch
      %38 = sbr.rel (0) target = $region13
    $region12: #{tpu_custom_call.1} parent=1 // pred_region
      %40 = vsyncadd [#allocation6], 0
      %s41 = sshll.u32 %s2, 4
      %s42 = int_to_ptr.hbm [resolvable:$true] %s41
      %s43 = sshll.u32 [#allocation7], 4
      %s44 = int_to_ptr.vmem [resolvable:$true] %s43
      %49 = dma.hbm_to_vmem [thread:$0]  %s42, 256, %s44, [#allocation6], 128, 128, 8
    $region13: #{tpu_custom_call.1} parent=1 // pred_fallthru
      _
    // Predicated region
    $region14: #{tpu_custom_call.1} parent=1 // pred_check
      _
    $region15: #{tpu_custom_call.1} parent=1 // pred_check_branch
      %51 = sbr.rel (0) target = $region17
    $region16: #{tpu_custom_call.1} parent=1 // pred_region
      %53 = dma.done [#allocation3], 256
    $region17: #{tpu_custom_call.1} parent=1 // pred_fallthru
      _
    // Predicated region
    $region18: #{tpu_custom_call.1} parent=1 // pred_check
      _
    $region19: #{tpu_custom_call.1} parent=1 // pred_check_branch
      %55 = sbr.rel (0) target = $region21
    $region20: #{tpu_custom_call.1} parent=1 // pred_region
      %57 = dma.done [#allocation6], 256
    $region21: #{tpu_custom_call.1} parent=1 // pred_fallthru
      _
    // Predicated region
    $region22: #{tpu_custom_call.1} parent=1 // pred_check
      _
    $region23: #{tpu_custom_call.1} parent=1 // pred_check_branch
      %59 = sbr.rel (0) target = $region25
    $region24: #{tpu_custom_call.1} parent=1 // pred_region
      %61 = dma.done [#allocation6], 256
    $region25: #{tpu_custom_call.1} parent=1 // pred_fallthru
      _
    %v62 = vld [vmem:[#allocation2] sm:$0xff]
    %v63 = vld [vmem:[#allocation2 + $0x8] sm:$0xff]
    %v64 = vld [vmem:[#allocation5] sm:$0xff]
    %v65 = vld [vmem:[#allocation5 + $0x8] sm:$0xff]
    %v66 = vld [vmem:[#allocation7] sm:$0xff]
    %v67 = vld [vmem:[#allocation7 + $0x8] sm:$0xff]
    %v68 = vsub.f32 %v62, %v64
    %v69 = vsub.f32 %v63, %v65
    %v70 = vand.u32 2147483647, %v68
    %v71 = vand.u32 2147483647, %v69
    %v72 = vmul.f32 %v70, %v66
    %v73 = vmul.f32 %v71, %v67
    %74 = vst [vmem:[#allocation8] sm:$0xff] %v72
    %75 = vst [vmem:[#allocation8 + $0x8] sm:$0xff] %v73
    // Predicated region
    $region26: #{tpu_custom_call.1} parent=1 // pred_check
      _
    $region27: #{tpu_custom_call.1} parent=1 // pred_check_branch
      %77 = sbr.rel (0) target = $region29
    $region28: #{tpu_custom_call.1} parent=1 // pred_region
      %79 = vsyncadd [#allocation4], 0
      %s80 = sshll.u32 [#allocation8], 4
      %s81 = int_to_ptr.vmem [resolvable:$true] %s80
      %s82 = sshll.u32 %s3, 4
      %s83 = int_to_ptr.hbm [resolvable:$true] %s82
      %88 = dma.vmem_to_hbm [thread:$0]  %s81, 256, %s83, [#allocation4], 128, 128, 8
    $region29: #{tpu_custom_call.1} parent=1 // pred_fallthru
      _
    // Predicated region
    $region30: #{tpu_custom_call.1} parent=1 // pred_check
      _
    $region31: #{tpu_custom_call.1} parent=1 // pred_check_branch
      %90 = sbr.rel (0) target = $region33
    $region32: #{tpu_custom_call.1} parent=1 // pred_region
      %92 = dma.done [#allocation4], 256
    $region33: #{tpu_custom_call.1} parent=1 // pred_fallthru
      _
    %93 = vsyncpa [#allocation3], 1
    %94 = vsyncpa [#allocation6], 1
    %95 = vsyncpa [#allocation4], 1

</llo_original>
